<compile_context>
chip_gen: v7x
topology: tpu7x:2x2x1
jax: 0.10.0
libtpu: 0.0.40
codegen_flags: <defaults>
</compile_context>

<pallas_src>
import math

import jax
import jax.numpy as jnp
from jax.experimental import pallas as pl
from jax.experimental.pallas import tpu as pltpu


_BLOCK_BUDGET_BYTES = 8 * 1024 * 1024    # one output block (it gets double-buffered)
_VMEM_LIMIT_BYTES = 32 * 1024 * 1024     # explicit scoped-VMEM limit; fits v7x's 64 MiB


def _pick_channel_block(canvas_shape, dtype):
    """Largest divisor of Cm whose padded (Hm, Wm) slab block fits the budget."""
    cm, hm, wm = canvas_shape
    itemsize = jnp.dtype(dtype).itemsize
    # Account for (8, 128) lane/sublane padding of the VMEM layout.
    slab_bytes = (((hm + 7) // 8) * 8) * (((wm + 127) // 128) * 128) * itemsize
    cb = 1
    for d in range(1, cm + 1):
        if cm % d == 0 and d * slab_bytes <= _BLOCK_BUDGET_BYTES:
            cb = d
    return cb


def _make_batch_kernel(image_shapes, canvas_shape, dtype, cb):
    """Build the fused pad-and-batch kernel.

    image_shapes: static (C, H, W) per image (shapes are known at trace time).
    canvas_shape: (Cm, Hm, Wm) of the zero-padded canvas.
    cb:           channel-block size (divides Cm).
    """
    n_images = len(image_shapes)
    cm, hm, wm = canvas_shape
    n_cblk = cm // cb

    def kernel(*refs):
        img_refs = refs[:n_images]        # raw HBM refs (memory_space=pl.ANY)
        out_ref = refs[n_images]          # (cb, Hm, Wm) VMEM output block
        copy_sem = refs[n_images + 1]     # DMA completion semaphore
        n = pl.program_id(0)              # which image (batch slab)
        c = pl.program_id(1)              # which channel block

        for i in range(n_images):
            C, H, W = image_shapes[i]
            img_ref = img_refs[i]

            def handle_image(C=C, H=H, W=W, img_ref=img_ref):
                for b in range(n_cblk):
                    ch0 = b * cb
                    nv = max(0, min(cb, C - ch0))   # valid channels in block

                    def handle_block(ch0=ch0, nv=nv, H=H, W=W, img_ref=img_ref):
                        if nv > 0:
                            src = img_ref.at[pl.ds(ch0, nv)]
                            if (H, W) == (hm, wm):
                                # Common PointPillars case: image spans the
                                # full canvas -> DMA HBM straight into the
                                # pipelined output block (one read, one write
                                # per byte; no extra VMEM pass).
                                cp = pltpu.make_async_copy(
                                    src, out_ref.at[pl.ds(0, nv)], copy_sem)
                                cp.start()
                                cp.wait()
                            else:
                                # Ragged image: stage the exact (nv, H, W)
                                # slab in VMEM, copy it into the canvas block,
                                # then zero ONLY the padding strips.
                                def staged(stg_ref):
                                    cp = pltpu.make_async_copy(
                                        src, stg_ref, copy_sem)
                                    cp.start()
                                    cp.wait()
                                    out_ref[:nv, :H, :W] = stg_ref[...]

                                pl.run_scoped(
                                    staged, pltpu.VMEM((nv, H, W), dtype))
                                if H < hm:
                                    out_ref[:nv, H:, :] = jnp.zeros(
                                        (nv, hm - H, wm), dtype)
                                if W < wm:
                                    out_ref[:nv, :H, W:] = jnp.zeros(
                                        (nv, H, wm - W), dtype)
                        if nv < cb:
                            # Canvas channels beyond this image's C.
                            out_ref[nv:, :, :] = jnp.zeros(
                                (cb - nv, hm, wm), dtype)

                    pl.when(c == b)(handle_block)

            pl.when(n == i)(handle_image)

    return kernel


def _batch_images_pallas(images, canvas_shape):
    n_images = len(images)
    cm, hm, wm = canvas_shape
    dtype = images[0].dtype
    for img in images:
        assert img.dtype == dtype, "all images must share a dtype"
    image_shapes = [tuple(int(d) for d in img.shape) for img in images]
    cb = _pick_channel_block(canvas_shape, dtype)
    kernel = _make_batch_kernel(image_shapes, canvas_shape, dtype, cb)
    # TODO(synk): if a single (Hm, Wm) channel slab ever exceeds the VMEM
    # budget, the spatial dims would need tiling as well; not required for
    # PointPillars-sized pseudo-images (e.g. 64x496x432 f32).
    return pl.pallas_call(
        kernel,
        out_shape=jax.ShapeDtypeStruct((n_images, cm, hm, wm), dtype),
        grid=(n_images, cm // cb),
        in_specs=[pl.BlockSpec(memory_space=pl.ANY) for _ in images],
        out_specs=pl.BlockSpec((None, cb, hm, wm),
                               lambda n, c: (n, c, 0, 0)),
        scratch_shapes=[pltpu.SemaphoreType.DMA],
        compiler_params=pltpu.CompilerParams(
            dimension_semantics=("parallel", "parallel"),
            vmem_limit_bytes=_VMEM_LIMIT_BYTES,
        ),
    )(*images)


class POINTPILLARTransform:
    """JAX/Pallas re-implementation of the PyTorch POINTPILLARTransform forward."""

    def __init__(self, min_size=200, max_size=200):
        if not isinstance(min_size, (list, tuple)):
            min_size = (min_size,)
        self.min_size = min_size
        self.max_size = max_size

    def __call__(self, images, targets=None):
        images = [img for img in images]
        for i in range(len(images)):
            image = images[i]
            target = targets[i] if targets is not None else targets
            if image.ndim != 3:
                raise ValueError(
                    "images is expected to be a list of 3d tensors of shape "
                    "[C, H, W], got {}".format(image.shape))
            images[i] = image
            if targets is not None:
                targets[i] = target
        image_sizes = [img.shape[-2:] for img in images]  # noqa: F841 (parity)
        batched = self.batch_images(images, size_divisible=1)
        return (batched, targets)

    def batch_images(self, images, size_divisible=1):
        max_size = [max(s) for s in zip(*[img.shape for img in images])]
        stride = size_divisible
        max_size[1] = int(math.ceil(float(max_size[1]) / stride) * stride)
        max_size[2] = int(math.ceil(float(max_size[2]) / stride) * stride)
        canvas = (int(max_size[0]), int(max_size[1]), int(max_size[2]))
        return _batch_images_pallas(images, canvas)


if __name__ == "__main__":
    key = jax.random.PRNGKey(0)
    k0, k1 = jax.random.split(key)

    # Two small CHW images of different shapes: exercises both the direct
    # (full-canvas) DMA path and the ragged pad-strip path.
    img0 = jax.random.normal(k0, (4, 16, 16), dtype=jnp.float32)
    img1 = jax.random.normal(k1, (3, 12, 10), dtype=jnp.float32)
    images = [img0, img1]

    transform = POINTPILLARTransform(min_size=200, max_size=200)
    batched, targets = transform(images, targets=None)
    batched = jax.block_until_ready(batched)

    # Reference check (plain JAX zero-pad), mirroring batch_images semantics.
    Cm, Hm, Wm = (max(s) for s in zip(*[img.shape for img in images]))
    ref = jnp.stack([
        jnp.pad(img, ((0, Cm - img.shape[0]),
                      (0, Hm - img.shape[1]),
                      (0, Wm - img.shape[2])))
        for img in images
    ], axis=0)

    assert batched.shape == (2, Cm, Hm, Wm), batched.shape
    assert batched.dtype == jnp.float32
    assert targets is None
    assert jnp.allclose(batched, ref), "Pallas padded batch mismatch vs reference"

    print("KERNEL_OK")
</pallas_src>

<mosaic_0001>
module attributes {stable_mosaic.version = 11 : i64} {
  func.func @kernel(%arg0: i32, %arg1: i32, %arg2: memref<4x16x16xf32, #tpu.memory_space<any>>, %arg3: memref<3x12x10xf32, #tpu.memory_space<any>>, %arg4: memref<1x4x16x16xf32, #tpu.memory_space<vmem>>, %arg5: memref<!tpu.dma_semaphore, #tpu.memory_space<semaphore_mem>>) attributes {dimension_semantics = [#tpu.dimension_semantics<parallel>, #tpu.dimension_semantics<parallel>], iteration_bounds = array<i64: 2, 1>, scalar_prefetch = 0 : i64, scratch_operands = 1 : i64, tpu.core_type = #tpu.core_type<tc>, window_params = [{}, {}, {transform_indices = @transform_2, window_bounds = array<i64: 1, 4, 16, 16>}]} {
    %c0_i32 = arith.constant 0 : i32
    %0 = arith.cmpi eq, %arg0, %c0_i32 : i32
    %1 = arith.extui %0 : i1 to i32
    %c0_i32_0 = arith.constant 0 : i32
    %2 = arith.cmpi ne, %1, %c0_i32_0 : i32
    scf.if %2 {
      %c0_i32_2 = arith.constant 0 : i32
      %6 = arith.cmpi eq, %arg1, %c0_i32_2 : i32
      %7 = arith.extui %6 : i1 to i32
      %c0_i32_3 = arith.constant 0 : i32
      %8 = arith.cmpi ne, %7, %c0_i32_3 : i32
      scf.if %8 {
        %c0_i32_4 = arith.constant 0 : i32
        %c0_i32_5 = arith.constant 0 : i32
        %c0_i32_6 = arith.constant 0 : i32
        %9 = tpu.memref_slice %arg2[%c0_i32_4, %c0_i32_5, %c0_i32_6] : memref<4x16x16xf32, #tpu.memory_space<any>> -> memref<4x16x16xf32, #tpu.memory_space<any>>
        %c0_i32_7 = arith.constant 0 : i32
        %c0_i32_8 = arith.constant 0 : i32
        %c0_i32_9 = arith.constant 0 : i32
        %c0_i32_10 = arith.constant 0 : i32
        %10 = tpu.memref_slice %arg4[%c0_i32_7, %c0_i32_8, %c0_i32_9, %c0_i32_10] : memref<1x4x16x16xf32, #tpu.memory_space<vmem>> -> memref<1x4x16x16xf32, #tpu.memory_space<vmem>>
        %11 = tpu.memref_squeeze %10 : memref<1x4x16x16xf32, #tpu.memory_space<vmem>> -> memref<4x16x16xf32, #tpu.memory_space<vmem>>
        tpu.enqueue_dma source(%9 : memref<4x16x16xf32, #tpu.memory_space<any>>) target(%11 : memref<4x16x16xf32, #tpu.memory_space<vmem>>) target_semaphore(%arg5 : memref<!tpu.dma_semaphore, #tpu.memory_space<semaphore_mem>>)
        %c0_i32_11 = arith.constant 0 : i32
        %c0_i32_12 = arith.constant 0 : i32
        %c0_i32_13 = arith.constant 0 : i32
        %12 = tpu.memref_slice %arg2[%c0_i32_11, %c0_i32_12, %c0_i32_13] : memref<4x16x16xf32, #tpu.memory_space<any>> -> memref<4x16x16xf32, #tpu.memory_space<any>>
        %c0_i32_14 = arith.constant 0 : i32
        %c0_i32_15 = arith.constant 0 : i32
        %c0_i32_16 = arith.constant 0 : i32
        %c0_i32_17 = arith.constant 0 : i32
        %13 = tpu.memref_slice %arg4[%c0_i32_14, %c0_i32_15, %c0_i32_16, %c0_i32_17] : memref<1x4x16x16xf32, #tpu.memory_space<vmem>> -> memref<1x4x16x16xf32, #tpu.memory_space<vmem>>
        %14 = tpu.memref_squeeze %13 : memref<1x4x16x16xf32, #tpu.memory_space<vmem>> -> memref<4x16x16xf32, #tpu.memory_space<vmem>>
        tpu.wait_dma2 semaphore(%arg5 : memref<!tpu.dma_semaphore, #tpu.memory_space<semaphore_mem>>) src(%12 : memref<4x16x16xf32, #tpu.memory_space<any>>) dst(%14 : memref<4x16x16xf32, #tpu.memory_space<vmem>>)
      } else {
      }
    } else {
    }
    %c1_i32 = arith.constant 1 : i32
    %3 = arith.cmpi eq, %arg0, %c1_i32 : i32
    %4 = arith.extui %3 : i1 to i32
    %c0_i32_1 = arith.constant 0 : i32
    %5 = arith.cmpi ne, %4, %c0_i32_1 : i32
    scf.if %5 {
      %c0_i32_2 = arith.constant 0 : i32
      %6 = arith.cmpi eq, %arg1, %c0_i32_2 : i32
      %7 = arith.extui %6 : i1 to i32
      %c0_i32_3 = arith.constant 0 : i32
      %8 = arith.cmpi ne, %7, %c0_i32_3 : i32
      scf.if %8 {
        "tpu.region"() ({
          %alloca = memref.alloca() : memref<3x12x10xf32, #tpu.memory_space<vmem>>
          %c0_i32_14 = arith.constant 0 : i32
          %c0_i32_15 = arith.constant 0 : i32
          %c0_i32_16 = arith.constant 0 : i32
          %21 = tpu.memref_slice %arg3[%c0_i32_14, %c0_i32_15, %c0_i32_16] : memref<3x12x10xf32, #tpu.memory_space<any>> -> memref<3x12x10xf32, #tpu.memory_space<any>>
          tpu.enqueue_dma source(%21 : memref<3x12x10xf32, #tpu.memory_space<any>>) target(%alloca : memref<3x12x10xf32, #tpu.memory_space<vmem>>) target_semaphore(%arg5 : memref<!tpu.dma_semaphore, #tpu.memory_space<semaphore_mem>>)
          %c0_i32_17 = arith.constant 0 : i32
          %c0_i32_18 = arith.constant 0 : i32
          %c0_i32_19 = arith.constant 0 : i32
          %22 = tpu.memref_slice %arg3[%c0_i32_17, %c0_i32_18, %c0_i32_19] : memref<3x12x10xf32, #tpu.memory_space<any>> -> memref<3x12x10xf32, #tpu.memory_space<any>>
          tpu.wait_dma2 semaphore(%arg5 : memref<!tpu.dma_semaphore, #tpu.memory_space<semaphore_mem>>) src(%22 : memref<3x12x10xf32, #tpu.memory_space<any>>) dst(%alloca : memref<3x12x10xf32, #tpu.memory_space<vmem>>)
          %c0_20 = arith.constant 0 : index
          %c0_21 = arith.constant 0 : index
          %c0_22 = arith.constant 0 : index
          %23 = vector.load %alloca[%c0_20, %c0_21, %c0_22] : memref<3x12x10xf32, #tpu.memory_space<vmem>>, vector<3x12x10xf32>
          %c0_23 = arith.constant 0 : index
          %c0_24 = arith.constant 0 : index
          %c0_25 = arith.constant 0 : index
          %c0_26 = arith.constant 0 : index
          %24 = vector.load %arg4[%c0_23, %c0_24, %c0_25, %c0_26] : memref<1x4x16x16xf32, #tpu.memory_space<vmem>>, vector<1x3x12x10xf32>
          %25 = vector.shape_cast %24 : vector<1x3x12x10xf32> to vector<3x12x10xf32>
          %26 = vector.shape_cast %23 : vector<3x12x10xf32> to vector<1x3x12x10xf32>
          tpu.vector_store %arg4[%c0_23, %c0_24, %c0_25, %c0_26], %26 {strides = array<i32>} : memref<1x4x16x16xf32, #tpu.memory_space<vmem>>, vector<1x3x12x10xf32>,
          tpu.yield
        }) : () -> ()
        %cst = arith.constant 0.000000e+00 : f32
        %9 = vector.broadcast %cst : f32 to vector<3x4x16xf32>
        %c0 = arith.constant 0 : index
        %c0_4 = arith.constant 0 : index
        %c12 = arith.constant 12 : index
        %c0_5 = arith.constant 0 : index
        %10 = vector.load %arg4[%c0, %c0_4, %c12, %c0_5] : memref<1x4x16x16xf32, #tpu.memory_space<vmem>>, vector<1x3x4x16xf32>
        %11 = vector.shape_cast %10 : vector<1x3x4x16xf32> to vector<3x4x16xf32>
        %12 = vector.shape_cast %9 : vector<3x4x16xf32> to vector<1x3x4x16xf32>
        tpu.vector_store %arg4[%c0, %c0_4, %c12, %c0_5], %12 {strides = array<i32>} : memref<1x4x16x16xf32, #tpu.memory_space<vmem>>, vector<1x3x4x16xf32>,
        %cst_6 = arith.constant 0.000000e+00 : f32
        %13 = vector.broadcast %cst_6 : f32 to vector<3x12x6xf32>
        %c0_7 = arith.constant 0 : index
        %c0_8 = arith.constant 0 : index
        %c0_9 = arith.constant 0 : index
        %c10 = arith.constant 10 : index
        %14 = vector.load %arg4[%c0_7, %c0_8, %c0_9, %c10] : memref<1x4x16x16xf32, #tpu.memory_space<vmem>>, vector<1x3x12x6xf32>
        %15 = vector.shape_cast %14 : vector<1x3x12x6xf32> to vector<3x12x6xf32>
        %16 = vector.shape_cast %13 : vector<3x12x6xf32> to vector<1x3x12x6xf32>
        tpu.vector_store %arg4[%c0_7, %c0_8, %c0_9, %c10], %16 {strides = array<i32>} : memref<1x4x16x16xf32, #tpu.memory_space<vmem>>, vector<1x3x12x6xf32>,
        %cst_10 = arith.constant 0.000000e+00 : f32
        %17 = vector.broadcast %cst_10 : f32 to vector<1x16x16xf32>
        %c0_11 = arith.constant 0 : index
        %c3 = arith.constant 3 : index
        %c0_12 = arith.constant 0 : index
        %c0_13 = arith.constant 0 : index
        %18 = vector.load %arg4[%c0_11, %c3, %c0_12, %c0_13] : memref<1x4x16x16xf32, #tpu.memory_space<vmem>>, vector<1x1x16x16xf32>
        %19 = vector.shape_cast %18 : vector<1x1x16x16xf32> to vector<1x16x16xf32>
        %20 = vector.shape_cast %17 : vector<1x16x16xf32> to vector<1x1x16x16xf32>
        tpu.vector_store %arg4[%c0_11, %c3, %c0_12, %c0_13], %20 {strides = array<i32>} : memref<1x4x16x16xf32, #tpu.memory_space<vmem>>, vector<1x1x16x16xf32>,
      } else {
      }
    } else {
    }
    return
  }
  func.func @transform_2(%arg0: i32, %arg1: i32) -> (i32, i32, i32, i32) {
    %c0_i32 = arith.constant 0 : i32
    %c0_i32_0 = arith.constant 0 : i32
    %c0_i32_1 = arith.constant 0 : i32
    return %arg0, %arg1, %c0_i32, %c0_i32_0 : i32, i32, i32, i32
  }
}

</mosaic_0001>

<llo_original>
// kernel: tpu_custom_call.1
$region0: #{tpu_custom_call.1}
  #allocation0 [shape = 'u32[]', space=smem, size = 0x4, offset = 0x4, fixed_abs, tag = 'smem constant byte address 0x4 - core index']
  #allocation1 [shape = 'u32[144,128]{1,0:T(1,128)}', space=vmem, size = 0x12000, scoped, tag = 'internal scratch']
  #allocation2 [shape = 's32[1]{0}', space=sflag, size = 0x4, scoped, tag = 'scratch operand']
  #allocation5 [shape = 's32[]', space=sflag, size = 0x4, offset = 0, fixed_abs, tag = 'sflag constant byte address 0x0 - dummy sync flag']
  #allocation7 [shape = 's32[]', space=sflag, size = 0x4, offset = 0, fixed_abs, tag = 'sflag constant byte address 0x0 - dummy sync flag']
  %s0 = inlined_call_operand.vmem [shape: f32[4,16,16], index: 0, kind: input, shape index: {}]
  %s1 = inlined_call_operand.vmem [shape: f32[3,12,10], index: 1, kind: input, shape index: {}]
  %s2 = inlined_call_operand.hbm [shape: f32[2,4,16,16], index: 2, kind: output, shape index: {}]
  %s3 = sld [smem:[#allocation0]]
  $region113: #{tpu_custom_call.1} parent=0
    _
  %s5 = ssub.s32 1, %s3
  %s6 = scalar_select 0, %s5, %s3
  $region1: #{tpu_custom_call.1} parent=0
    #allocation3 [shape = 'u8[65536]{0}', space=vmem, size = 0x10000, scoped, tag = 'output window, operand 0']
    #allocation4 [shape = 's32[2]{0}', space=sflag, size = 0x8, scoped, tag = 'scoped memory for tpu_custom_call.1']
    %7 = vsyncpa [#allocation4], 0
    %s8 = scalar_lea.sflag [#allocation4], 1
    %9 = vsyncpa %s8, 0
    loop: start=0, step=1, limit=3
    $region2: #{tpu_custom_call.1} parent=1 // loop_pre_header
      _
    $region3: #{tpu_custom_call.1} parent=1 // loop_header
      %s11 = sphi 0, %s15
      %p12 = scmp.ge.s32.totalorder %s11, 3
      %s17 = sphi 0, %s27
      %s18 = sphi 0, %s23
      %s19 = sphi 0, %s17
      %s20 = sphi 0, %s18
      %s32 = sphi 0, %s34
      %s35 = sphi 0, %s32
      %s45 = sphi 0, %s35
    $region4: #{tpu_custom_call.1} parent=1 // loop_header_branch
      %14 = sbr.rel (%p12) target = $region8
    $region5: #{tpu_custom_call.1} parent=1 // loop_body
      %s16 = ssub.s32 %s11, 1
      %s21 = sadd.s32 1, %s18
      %p22 = scmp.ge.s32.totalorder %s21, 1
      %s23 = scalar_select %p22, 0, %s21
      %s24 = sadd.s32 1, %s17
      %s25 = scalar_select %p22, %s24, %s17
      %p26 = scmp.ge.s32.totalorder %s25, 2
      %s27 = scalar_select %p26, 0, %s25
      %s28 = ssub.s32 %s17, %s27
      %s29 = ssub.s32 %s18, %s23
      %s30 = sor.u32 %s28, %s29
      %p31 = scmp.eq.s32.totalorder %s30, 0
      %s33 = sadd.s32 %s32, 1
      %s34 = scalar_select %p31, %s32, %s33
      %p36 = pneg %p31
      %p37 = scmp.eq.s32.totalorder %s11, 1
      %p38 = por %p36, %p37
      %p39 = scmp.ne.s32.totalorder %s32, %s35
      %p40 = scmp.eq.s32.totalorder %s11, 0
      %p41 = por %p39, %p40
      %p42 = scmp.ne.s32.totalorder %s32, %s35
      %p43 = scmp.eq.s32.totalorder %s16, 1
      %p44 = por %p42, %p43
      %p46 = scmp.ne.s32.totalorder %s35, %s45
      %p47 = scmp.eq.s32.totalorder %s16, 0
      %p48 = por %p46, %p47
      %p49 = scmp.lt.s32.totalorder %s11, 2
      // Predicated region
      $region9: #{tpu_custom_call.1} parent=5 // pred_check
        %p50 = pneg %p49
      $region10: #{tpu_custom_call.1} parent=5 // pred_check_branch
        %52 = sbr.rel (%p50) target = $region12
      $region11: #{tpu_custom_call.1} parent=5 // pred_region
        %p53 = pneg %p41
        %p54 = pneg %p38
        %s55 = sand.u32 %s32, 1
        %s56 = scalar_lea.sflag [#allocation4], %s55
        %s57 = sand.u32 %s32, 1
        %s58 = smul.addr %s57, 64
        %s59 = scalar_lea.vmem [#allocation3], %s58
        %s60 = smul.u32 4, %s18
        %p61 = scmp.eq.s32.totalorder %s17, 0
        // Predicated region
        $region13: #{tpu_custom_call.1} parent=11 // pred_check
          %p62 = pneg %p61
        $region14: #{tpu_custom_call.1} parent=11 // pred_check_branch
          %64 = sbr.rel (%p62) target = $region16
        $region15: #{tpu_custom_call.1} parent=11 // pred_region
          %p65 = scmp.eq.s32.totalorder %s18, 0
          // Predicated region
          $region17: #{tpu_custom_call.1} parent=15 // pred_check
            %p66 = pneg %p65
          $region18: #{tpu_custom_call.1} parent=15 // pred_check_branch
            %68 = sbr.rel (%p66) target = $region20
          $region19: #{tpu_custom_call.1} parent=15 // pred_region
            %p70 = scmp.lt.u32.totalorder 64, 8
            %p71 = pneg %p70
            // Predicated region
            $region21: #{tpu_custom_call.1} parent=19 // pred_check
              _
            $region22: #{tpu_custom_call.1} parent=19 // pred_check_branch
              %73 = sbr.rel (%p70) target = $region24
            $region23: #{tpu_custom_call.1} parent=19 // pred_region
              %s88 = sand.u32 64, 7
              %p89 = scmp.eq.s32.totalorder %s88, 0
              // Predicated region
              $region36: #{tpu_custom_call.1} parent=23 // pred_check
                %p90 = pneg %p89
              $region37: #{tpu_custom_call.1} parent=23 // pred_check_branch
                %92 = sbr.rel (%p90) target = $region39
              $region38: #{tpu_custom_call.1} parent=23 // pred_region
                loop: start=0, step=1, limit=1
                $region40: #{tpu_custom_call.1} parent=38 // loop_pre_header
                  _
                $region41: #{tpu_custom_call.1} parent=38 // loop_header
                  %s94 = sphi 0, %s98
                  %p95 = scmp.ge.s32.totalorder %s94, 1
                  %s99 = sphi %s0, %s0
                  %s100 = sphi %s59, %s59
                $region42: #{tpu_custom_call.1} parent=38 // loop_header_branch
                  %97 = sbr.rel (%p95) target = $region46
                $region43: #{tpu_custom_call.1} parent=38 // loop_body
                  %v101 = vld [vmem:[%s99] sm:$0xff]
                  %102 = vst [vmem:[%s100] sm:$0xff] %v101
                  %v103 = vld [vmem:[%s99 + $0x8] sm:$0xff]
                  %104 = vst [vmem:[%s100 + $0x8] sm:$0xff] %v103
                  %v105 = vld [vmem:[%s99 + $0x10] sm:$0xff]
                  %106 = vst [vmem:[%s100 + $0x10] sm:$0xff] %v105
                  %v107 = vld [vmem:[%s99 + $0x18] sm:$0xff]
                  %108 = vst [vmem:[%s100 + $0x18] sm:$0xff] %v107
                  %v109 = vld [vmem:[%s99 + $0x20] sm:$0xff]
                  %110 = vst [vmem:[%s100 + $0x20] sm:$0xff] %v109
                  %v111 = vld [vmem:[%s99 + $0x28] sm:$0xff]
                  %112 = vst [vmem:[%s100 + $0x28] sm:$0xff] %v111
                  %v113 = vld [vmem:[%s99 + $0x30] sm:$0xff]
                  %114 = vst [vmem:[%s100 + $0x30] sm:$0xff] %v113
                  %v115 = vld [vmem:[%s99 + $0x38] sm:$0xff]
                  %116 = vst [vmem:[%s100 + $0x38] sm:$0xff] %v115
                $region44: #{tpu_custom_call.1} parent=38 // loop_footer
                  %s98 = sadd.s32 1, %s94
                $region45: #{tpu_custom_call.1} parent=38 // loop_footer_branch
                  %93 = sbr.rel target = $region41
                $region46: #{tpu_custom_call.1} parent=38 // loop_exit
                  _
              $region39: #{tpu_custom_call.1} parent=23 // pred_fallthru
                _
              %p117 = pneg %p89
              // Predicated region
              $region47: #{tpu_custom_call.1} parent=23 // pred_check
                _
              $region48: #{tpu_custom_call.1} parent=23 // pred_check_branch
                %119 = sbr.rel (%p89) target = $region50
              $region49: #{tpu_custom_call.1} parent=23 // pred_region
                %s120 = sand.u32 64, 7
              $region50: #{tpu_custom_call.1} parent=23 // pred_fallthru
                _
            $region24: #{tpu_custom_call.1} parent=19 // pred_fallthru
              _
            // Predicated region
            $region25: #{tpu_custom_call.1} parent=19 // pred_check
              %p74 = pneg %p70
            $region26: #{tpu_custom_call.1} parent=19 // pred_check_branch
              %76 = sbr.rel (%p74) target = $region28
            $region27: #{tpu_custom_call.1} parent=19 // pred_region
              %s77 = sshllo.u32 0, 64
              loop: start=0, step=1, limit=1
              $region29: #{tpu_custom_call.1} parent=27 // loop_pre_header
                _
              $region30: #{tpu_custom_call.1} parent=27 // loop_header
                %s79 = sphi 0, %s83
                %p80 = scmp.ge.s32.totalorder %s79, 1
                %s84 = sphi %s0, %s0
                %s85 = sphi %s59, %s59
              $region31: #{tpu_custom_call.1} parent=27 // loop_header_branch
                %82 = sbr.rel (%p80) target = $region35
              $region32: #{tpu_custom_call.1} parent=27 // loop_body
                %v86 = vld [vmem:[%s84] sm:%s77]
                %87 = vst [vmem:[%s85] sm:%s77] %v86
              $region33: #{tpu_custom_call.1} parent=27 // loop_footer
                %s83 = sadd.s32 1, %s79
              $region34: #{tpu_custom_call.1} parent=27 // loop_footer_branch
                %78 = sbr.rel target = $region30
              $region35: #{tpu_custom_call.1} parent=27 // loop_exit
                _
            $region28: #{tpu_custom_call.1} parent=19 // pred_fallthru
              _
            // Predicated region
            $region51: #{tpu_custom_call.1} parent=19 // pred_check
              _
            $region52: #{tpu_custom_call.1} parent=19 // pred_check_branch
              %123 = sbr.rel (0) target = $region54
            $region53: #{tpu_custom_call.1} parent=19 // pred_region
              %124 = vsyncadd [#allocation2], 1024
            $region54: #{tpu_custom_call.1} parent=19 // pred_fallthru
              _
            %s125 = smul.u32 4, 16
            %s126 = smul.u32 %s125, 1
            %s127 = sshll.u32 %s126, 4
            %128 = dma.done [#allocation2], %s127
          $region20: #{tpu_custom_call.1} parent=15 // pred_fallthru
            _
        $region16: #{tpu_custom_call.1} parent=11 // pred_fallthru
          _
        %p129 = scmp.eq.s32.totalorder %s17, 1
        // Predicated region
        $region55: #{tpu_custom_call.1} parent=11 // pred_check
          %p130 = pneg %p129
        $region56: #{tpu_custom_call.1} parent=11 // pred_check_branch
          %132 = sbr.rel (%p130) target = $region58
        $region57: #{tpu_custom_call.1} parent=11 // pred_region
          %p133 = scmp.eq.s32.totalorder %s18, 0
          // Predicated region
          $region59: #{tpu_custom_call.1} parent=57 // pred_check
            %p134 = pneg %p133
          $region60: #{tpu_custom_call.1} parent=57 // pred_check_branch
            %136 = sbr.rel (%p134) target = $region62
          $region61: #{tpu_custom_call.1} parent=57 // pred_region
            $region63: #{tpu_custom_call.1} parent=61
              #allocation6 [shape = 'u8[18432]{0}', space=vmem, size = 0x4800, scoped, tag = 'scoped memory for tpu_custom_call.1']
              %p138 = scmp.lt.u32.totalorder 12, 8
              %p139 = pneg %p138
              // Predicated region
              $region64: #{tpu_custom_call.1} parent=63 // pred_check
                _
              $region65: #{tpu_custom_call.1} parent=63 // pred_check_branch
                %141 = sbr.rel (%p138) target = $region67
              $region66: #{tpu_custom_call.1} parent=63 // pred_region
                %s160 = sand.u32 12, 7
                %p161 = scmp.eq.s32.totalorder %s160, 0
                %p162 = pneg %p161
                // Predicated region
                $region79: #{tpu_custom_call.1} parent=66 // pred_check
                  _
                $region80: #{tpu_custom_call.1} parent=66 // pred_check_branch
                  %164 = sbr.rel (%p161) target = $region82
                $region81: #{tpu_custom_call.1} parent=66 // pred_region
                  %s165 = sand.u32 12, 7
                  %s166 = ssub.s32 12, %s165
                  %s167 = scalar_lea.vmem %s1, %s166
                  %s168 = ssub.s32 12, %s165
                  %s169 = scalar_lea.vmem [#allocation6], %s168
                  loop: start=0, step=1, limit=1
                  $region83: #{tpu_custom_call.1} parent=81 // loop_pre_header
                    _
                  $region84: #{tpu_custom_call.1} parent=81 // loop_header
                    %s171 = sphi 0, %s175
                    %p172 = scmp.ge.s32.totalorder %s171, 1
                    %s176 = sphi %s1, %s1
                    %s177 = sphi [#allocation6], [#allocation6]
                  $region85: #{tpu_custom_call.1} parent=81 // loop_header_branch
                    %174 = sbr.rel (%p172) target = $region89
                  $region86: #{tpu_custom_call.1} parent=81 // loop_body
                    %v178 = vld [vmem:[%s176] sm:$0xff]
                    %179 = vst [vmem:[%s177] sm:$0xff] %v178
                    %v180 = vld [vmem:[%s176 + $0x10] sm:$0xff]
                    %181 = vst [vmem:[%s177 + $0xc] sm:$0xff] %v180
                    %v182 = vld [vmem:[%s176 + $0x20] sm:$0xff]
                    %183 = vst [vmem:[%s177 + $0x18] sm:$0xff] %v182
                  $region87: #{tpu_custom_call.1} parent=81 // loop_footer
                    %s175 = sadd.s32 1, %s171
                  $region88: #{tpu_custom_call.1} parent=81 // loop_footer_branch
                    %170 = sbr.rel target = $region84
                  $region89: #{tpu_custom_call.1} parent=81 // loop_exit
                    _
                  %s184 = sshllo.u32 0, %s165
                  loop: start=0, step=1, limit=1
                  $region90: #{tpu_custom_call.1} parent=81 // loop_pre_header
                    _
                  $region91: #{tpu_custom_call.1} parent=81 // loop_header
                    %s186 = sphi 0, %s190
                    %p187 = scmp.ge.s32.totalorder %s186, 1
                    %s191 = sphi %s167, %s167
                    %s192 = sphi %s169, %s169
                  $region92: #{tpu_custom_call.1} parent=81 // loop_header_branch
                    %189 = sbr.rel (%p187) target = $region96
                  $region93: #{tpu_custom_call.1} parent=81 // loop_body
                    %v193 = vld [vmem:[%s191] sm:%s184]
                    %194 = vst [vmem:[%s192] sm:%s184] %v193
                    %v195 = vld [vmem:[%s191 + $0x10] sm:%s184]
                    %196 = vst [vmem:[%s192 + $0xc] sm:%s184] %v195
                    %v197 = vld [vmem:[%s191 + $0x20] sm:%s184]
                    %198 = vst [vmem:[%s192 + $0x18] sm:%s184] %v197
                  $region94: #{tpu_custom_call.1} parent=81 // loop_footer
                    %s190 = sadd.s32 1, %s186
                  $region95: #{tpu_custom_call.1} parent=81 // loop_footer_branch
                    %185 = sbr.rel target = $region91
                  $region96: #{tpu_custom_call.1} parent=81 // loop_exit
                    _
                $region82: #{tpu_custom_call.1} parent=66 // pred_fallthru
                  _
              $region67: #{tpu_custom_call.1} parent=63 // pred_fallthru
                _
              // Predicated region
              $region68: #{tpu_custom_call.1} parent=63 // pred_check
                %p142 = pneg %p138
              $region69: #{tpu_custom_call.1} parent=63 // pred_check_branch
                %144 = sbr.rel (%p142) target = $region71
              $region70: #{tpu_custom_call.1} parent=63 // pred_region
                %s145 = sshllo.u32 0, 12
                loop: start=0, step=1, limit=1
                $region72: #{tpu_custom_call.1} parent=70 // loop_pre_header
                  _
                $region73: #{tpu_custom_call.1} parent=70 // loop_header
                  %s147 = sphi 0, %s151
                  %p148 = scmp.ge.s32.totalorder %s147, 1
                  %s152 = sphi %s1, %s1
                  %s153 = sphi [#allocation6], [#allocation6]
                $region74: #{tpu_custom_call.1} parent=70 // loop_header_branch
                  %150 = sbr.rel (%p148) target = $region78
                $region75: #{tpu_custom_call.1} parent=70 // loop_body
                  %v154 = vld [vmem:[%s152] sm:%s145]
                  %155 = vst [vmem:[%s153] sm:%s145] %v154
                  %v156 = vld [vmem:[%s152 + $0x10] sm:%s145]
                  %157 = vst [vmem:[%s153 + $0xc] sm:%s145] %v156
                  %v158 = vld [vmem:[%s152 + $0x20] sm:%s145]
                  %159 = vst [vmem:[%s153 + $0x18] sm:%s145] %v158
                $region76: #{tpu_custom_call.1} parent=70 // loop_footer
                  %s151 = sadd.s32 1, %s147
                $region77: #{tpu_custom_call.1} parent=70 // loop_footer_branch
                  %146 = sbr.rel target = $region73
                $region78: #{tpu_custom_call.1} parent=70 // loop_exit
                  _
              $region71: #{tpu_custom_call.1} parent=63 // pred_fallthru
                _
              // Predicated region
              $region97: #{tpu_custom_call.1} parent=63 // pred_check
                _
              $region98: #{tpu_custom_call.1} parent=63 // pred_check_branch
                %201 = sbr.rel (0) target = $region100
              $region99: #{tpu_custom_call.1} parent=63 // pred_region
                %202 = vsyncadd [#allocation2], 576
              $region100: #{tpu_custom_call.1} parent=63 // pred_fallthru
                _
              %s203 = smul.u32 3, 12
              %s204 = smul.u32 %s203, 1
              %s205 = sshll.u32 %s204, 4
              %206 = dma.done [#allocation2], %s205
              %v207 = vld [vmem:[#allocation6] sm:$0xff]
              %v208 = vld [vmem:[#allocation6 + $0x8] sm:$0xf]
              %v209 = vld [vmem:[#allocation6 + $0xc] sm:$0xff]
              %v210 = vld [vmem:[#allocation6 + $0x14] sm:$0xf]
              %v211 = vld [vmem:[#allocation6 + $0x18] sm:$0xff]
              %v212 = vld [vmem:[#allocation6 + $0x20] sm:$0xf]
              %vm213 = vcmask 80896
              %214 = vst.msk [vmem:[%s59] sm:$0xff] %vm213, %v207
              %vm215 = vcmask 76800
              %216 = vst.msk [vmem:[%s59 + $0x8] sm:$0xf] %vm215, %v208
              %217 = vst.msk [vmem:[%s59 + $0x10] sm:$0xff] %vm213, %v209
              %218 = vst.msk [vmem:[%s59 + $0x18] sm:$0xf] %vm215, %v210
              %219 = vst.msk [vmem:[%s59 + $0x20] sm:$0xff] %vm213, %v211
              %220 = vst.msk [vmem:[%s59 + $0x28] sm:$0xf] %vm215, %v212
            %vm221 = vcmask 125952
            %222 = vst.msk [vmem:[%s59 + $0xc] sm:$0xf] %vm221, 0.0
            %223 = vst.msk [vmem:[%s59 + $0x1c] sm:$0xf] %vm221, 0.0
            %224 = vst.msk [vmem:[%s59 + $0x2c] sm:$0xf] %vm221, 0.0
            %vm225 = vcmask 130128
            %226 = vst.msk [vmem:[%s59] sm:$0xff] %vm225, 0.0
            %vm227 = vcmask 126032
            %228 = vst.msk [vmem:[%s59 + $0x8] sm:$0xf] %vm227, 0.0
            %229 = vst.msk [vmem:[%s59 + $0x10] sm:$0xff] %vm225, 0.0
            %230 = vst.msk [vmem:[%s59 + $0x18] sm:$0xf] %vm227, 0.0
            %231 = vst.msk [vmem:[%s59 + $0x20] sm:$0xff] %vm225, 0.0
            %232 = vst.msk [vmem:[%s59 + $0x28] sm:$0xf] %vm227, 0.0
            %s233 = scalar_lea.vmem %s59, 48 [#allocation3]
            %vm234 = vcmask 130048
            %235 = vst.msk [vmem:[%s233] sm:$0xff] %vm234, 0.0
            %236 = vst.msk [vmem:[%s233 + $0x8] sm:$0xff] %vm234, 0.0
          $region62: #{tpu_custom_call.1} parent=57 // pred_fallthru
            _
        $region58: #{tpu_custom_call.1} parent=11 // pred_fallthru
          _
        %s237 = sand.u32 %s32, 1
        %s238 = scalar_lea.sflag [#allocation4], %s237
        %s239 = sand.u32 %s32, 1
        %s240 = smul.addr %s239, 64
        %s241 = scalar_lea.vmem [#allocation3], %s240
        // Predicated region
        $region101: #{tpu_custom_call.1} parent=11 // pred_check
          %p242 = pneg %p38
        $region102: #{tpu_custom_call.1} parent=11 // pred_check_branch
          %244 = sbr.rel (%p242) target = $region104
        $region103: #{tpu_custom_call.1} parent=11 // pred_region
          %s245 = smul.u32 4, %s18
          %s247 = ssub.s32 1024, 1024
          %248 = vsyncadd %s238, %s247
          %s249 = smul.addr %s245, 2
          %s250 = smul.addr %s17, 8
          %s251 = sadd.s32 %s249, %s250
          %s252 = smul.addr %s251, 128
          %s253 = scalar_lea.hbm %s2, %s252
          %s254 = sshll.u32 %s241, 4
          %s255 = int_to_ptr.vmem [resolvable:$true] %s254
          %260 = dma.vmem_to_hbm [thread:$0]  %s255, 1024, %s253, %s238, 128, 128, 8
        $region104: #{tpu_custom_call.1} parent=11 // pred_fallthru
          _
      $region12: #{tpu_custom_call.1} parent=5 // pred_fallthru
        _
      %p261 = scmp.le.s32.totalorder 1, %s11
      // Predicated region
      $region105: #{tpu_custom_call.1} parent=5 // pred_check
        %p262 = pneg %p261
      $region106: #{tpu_custom_call.1} parent=5 // pred_check_branch
        %264 = sbr.rel (%p262) target = $region108
      $region107: #{tpu_custom_call.1} parent=5 // pred_region
        %s265 = ssub.s32 %s11, 1
        // Predicated region
        $region109: #{tpu_custom_call.1} parent=107 // pred_check
          %p266 = pneg %p44
        $region110: #{tpu_custom_call.1} parent=107 // pred_check_branch
          %268 = sbr.rel (%p266) target = $region112
        $region111: #{tpu_custom_call.1} parent=107 // pred_region
          %s269 = sand.u32 %s35, 1
          %s270 = scalar_lea.sflag [#allocation4], %s269
          %s271 = sand.u32 %s35, 1
          %s272 = smul.addr %s271, 64
          %s273 = scalar_lea.vmem [#allocation3], %s272
          %274 = dma.done %s270, 1024
        $region112: #{tpu_custom_call.1} parent=107 // pred_fallthru
          _
      $region108: #{tpu_custom_call.1} parent=5 // pred_fallthru
        _
    $region6: #{tpu_custom_call.1} parent=1 // loop_footer
      %s15 = sadd.s32 1, %s11
    $region7: #{tpu_custom_call.1} parent=1 // loop_footer_branch
      %10 = sbr.rel target = $region3
    $region8: #{tpu_custom_call.1} parent=1 // loop_exit
      _
    %275 = vsyncpa [#allocation4], 1
    %s276 = scalar_lea.sflag [#allocation4], 1
    %277 = vsyncpa %s276, 1
  %278 = vsyncmov [#allocation2]
  %s279 = vpop.sfrf %278
  %p280 = scmp.eq.s32.totalorder %s279, 0
  %p281 = pneg %p280
  %283 = shalt.err (%p281)

</llo_original>
